<compile_context>
chip_gen: v6e
topology: v6e:2x2x1
jax: 0.10.0
libtpu: 0.0.40
codegen_flags: <defaults>
</compile_context>

<pallas_src>
import functools

import numpy as np
import jax
import jax.numpy as jnp
from jax import lax
from jax.experimental import pallas as pl
from jax.experimental.pallas import tpu as pltpu


def _round_up(v, m):
    return (v + m - 1) // m * m


def _sepconv_kernel(x_ref, wc_ref, o_ref, patch_ref, *, k, dilation, wp, c_pad, tl):
    """One (batch, L-tile) step of the fused separable conv.

    x_ref     : (1, 1, c_pad, tl + halo)  haloed, zero-padded, row-flattened input tile
    wc_ref    : (c_out_p, k*k*c_pad)      folded depthwise*pointwise weight
    o_ref     : (1, c_out_p, tl)          dense conv output tile (lane-dense)
    patch_ref : (k*k*c_pad, tl)           VMEM scratch: im2col patch matrix
    """
    # Build the im2col patch matrix: one STATIC, contiguous lane window per tap.
    # Every write covers a full c_pad (sublane-aligned) row group.
    for kh in range(k):
        for kw in range(k):
            tap = kh * k + kw
            off = (kh * wp + kw) * dilation          # static flat offset of this tap
            patch_ref[tap * c_pad:(tap + 1) * c_pad, :] = x_ref[0, 0, :, off:off + tl]

    # Single MXU matmul, contraction = k*k*c_pad, f32 accumulation, cast at store.
    acc = jnp.dot(wc_ref[...], patch_ref[...], preferred_element_type=jnp.float32)
    o_ref[0] = acc.astype(o_ref.dtype)               # (c_out_p, tl) unmasked stores


def separable_conv2d(x_nchw, dw_weight, pw_weight, *, stride=1, padding=0,
                     dilation=1, compute_dtype=None):
    """x_nchw: (N, Cin, H, W); dw_weight: (Cin, 1, k, k); pw_weight: (Cout, Cin, 1, 1)."""
    n, c_in, h, w = x_nchw.shape
    k = int(dw_weight.shape[-1])
    c_out = int(pw_weight.shape[0])
    out_dtype = np.dtype(x_nchw.dtype)
    compute_dtype = np.dtype(out_dtype if compute_dtype is None else compute_dtype)

    h_out = (h + 2 * padding - dilation * (k - 1) - 1) // stride + 1
    w_out = (w + 2 * padding - dilation * (k - 1) - 1) // stride + 1

    # --- alignment padding --------------------------------------------------
    sub_c = max(8, 32 // compute_dtype.itemsize)      # sublane group (8 f32, 16 bf16)
    sub_o = max(8, 32 // out_dtype.itemsize)
    c_pad = _round_up(c_in, sub_c)
    c_out_p = _round_up(c_out, sub_o)
    kk_c = k * k * c_pad

    # --- spatial zero-pad, channel pad, row-flatten ---------------------------
    # TODO(synk): fold the border zero-pad into the kernel (mask border taps) to
    # avoid this extra HBM round trip of the input.
    xc = x_nchw.astype(compute_dtype)
    xp = jnp.pad(xc, ((0, 0), (0, c_pad - c_in),
                      (padding, padding), (padding, padding)))
    hp, wp = xp.shape[2], xp.shape[3]
    h_dense = hp - dilation * (k - 1)                 # stride-1 dense output height
    l_out = h_dense * wp                              # wrapped dense output lanes

    # --- L-tile size from a per-generation VMEM budget -----------------------
    max_off = dilation * ((k - 1) * wp + (k - 1))     # largest static tap offset
    halo = _round_up(max_off, 128) if max_off else 0
    try:
        vmem_cap = int(pltpu.get_tpu_info().vmem_capacity_bytes)
    except Exception:                                  # pragma: no cover
        vmem_cap = 64 * 1024 * 1024                    # v7x floor
    vmem_limit = (min(vmem_cap, 128 * 1024 * 1024) * 3) // 4
    budget = (vmem_limit * 17) // 20                   # ~85% of the scoped limit

    cbytes = compute_dtype.itemsize
    obytes = out_dtype.itemsize
    tl_floor = max(128, halo)
    tl_cap = max(min(_round_up(l_out, 128), 2048), tl_floor)
    tl = tl_floor
    cand = tl_cap
    while cand >= tl_floor:
        need = (2 * c_pad * (cand + halo) * cbytes     # double-buffered input tiles
                + 2 * c_out_p * kk_c * cbytes          # folded weight
                + kk_c * cand * cbytes                 # im2col patch scratch
                + 2 * c_out_p * cand * obytes)         # double-buffered output tiles
        if need <= budget:
            tl = cand
            break
        cand -= 128
    num_tiles = pl.cdiv(l_out, tl)
    tlh = tl + halo

    # --- haloed input tiles via reshape + concat (keeps kernel offsets static)
    lp = (num_tiles + 1) * tl
    x_flat = jnp.pad(xp.reshape(n, c_pad, hp * wp),
                     ((0, 0), (0, 0), (0, lp - hp * wp)))
    xa = x_flat.reshape(n, c_pad, num_tiles + 1, tl)
    if halo:
        x_tiled = jnp.concatenate([xa[:, :, :num_tiles, :],
                                   xa[:, :, 1:, :halo]], axis=3)
    else:
        x_tiled = xa[:, :, :num_tiles, :]
    x_tiled = jnp.transpose(x_tiled, (0, 2, 1, 3))     # (n, T, c_pad, tlh)

    # --- fold depthwise into pointwise (in f32), zero-pad, cast once ---------
    dwk = jnp.transpose(dw_weight[:, 0].astype(jnp.float32), (1, 2, 0))  # (k,k,Cin)
    dwk = dwk.reshape(k * k, c_in)
    pwm = pw_weight[:, :, 0, 0].astype(jnp.float32)                      # (Cout,Cin)
    wc = pwm[:, None, :] * dwk[None, :, :]                               # (Cout,k*k,Cin)
    wc = jnp.pad(wc, ((0, c_out_p - c_out), (0, 0), (0, c_pad - c_in)))
    wc = wc.reshape(c_out_p, kk_c).astype(compute_dtype)

    kernel = functools.partial(_sepconv_kernel, k=k, dilation=dilation,
                               wp=wp, c_pad=c_pad, tl=tl)

    out_flat = pl.pallas_call(
        kernel,
        out_shape=jax.ShapeDtypeStruct((n, c_out_p, num_tiles * tl), out_dtype),
        grid=(n, num_tiles),
        in_specs=[
            pl.BlockSpec((1, 1, c_pad, tlh), lambda b, t: (b, t, 0, 0)),
            pl.BlockSpec((c_out_p, kk_c), lambda b, t: (0, 0)),
        ],
        out_specs=pl.BlockSpec((1, c_out_p, tl), lambda b, t: (b, 0, t)),
        scratch_shapes=[pltpu.VMEM((kk_c, tl), compute_dtype)],
        compiler_params=pltpu.CompilerParams(
            dimension_semantics=("parallel", "parallel"),
            vmem_limit_bytes=int(vmem_limit)),
        cost_estimate=pl.CostEstimate(
            flops=2 * n * num_tiles * tl * c_out_p * kk_c,
            transcendentals=0,
            bytes_accessed=int(x_tiled.size * cbytes + wc.size * cbytes
                               + n * c_out_p * num_tiles * tl * obytes)),
    )(x_tiled, wc)

    # Undo the row wrap / padding.  Stride is applied by subsampling the dense
    # (stride-1) result, which is exactly strided-conv semantics.
    # TODO(synk): for stride>1, subsample inside the kernel before the store to
    # avoid the redundant dense columns and the extra output gather here.
    out4 = out_flat[:, :c_out, :l_out].reshape(n, c_out, h_dense, wp)
    if stride == 1:
        return out4[:, :, :h_out, :w_out]
    return out4[:, :, ::stride, ::stride][:, :, :h_out, :w_out]


def _reference(x_nchw, dw_weight, pw_weight, *, stride, padding, dilation):
    """Pure-JAX reference matching torch.nn.Conv2d semantics (NCHW)."""
    c_in = x_nchw.shape[1]
    dn = lax.conv_dimension_numbers(x_nchw.shape, dw_weight.shape,
                                    ("NCHW", "OIHW", "NCHW"))
    y = lax.conv_general_dilated(
        x_nchw, dw_weight, window_strides=(stride, stride),
        padding=((padding, padding), (padding, padding)),
        rhs_dilation=(dilation, dilation),
        dimension_numbers=dn, feature_group_count=c_in)
    dn2 = lax.conv_dimension_numbers(y.shape, pw_weight.shape,
                                     ("NCHW", "OIHW", "NCHW"))
    return lax.conv_general_dilated(
        y, pw_weight, window_strides=(1, 1), padding=((0, 0), (0, 0)),
        dimension_numbers=dn2)


if __name__ == "__main__":
    # Small shapes consistent with the module: N=2, Cin=4, Cout=8, 16x16, k=3.
    N, C_IN, C_OUT, H, W = 2, 4, 8, 16, 16
    K, STRIDE, PAD, DIL = 3, 1, 1, 1

    key = jax.random.PRNGKey(0)
    kx, kdw, kpw = jax.random.split(key, 3)
    x = jax.random.normal(kx, (N, C_IN, H, W), dtype=jnp.float32)
    dw_weight = jax.random.normal(kdw, (C_IN, 1, K, K), dtype=jnp.float32) * 0.1
    pw_weight = jax.random.normal(kpw, (C_OUT, C_IN, 1, 1), dtype=jnp.float32) * 0.1

    ref = _reference(x, dw_weight, pw_weight, stride=STRIDE, padding=PAD, dilation=DIL)

    # 1) exact-dtype path (compute in the input dtype, f32 here).
    fn = jax.jit(functools.partial(separable_conv2d, stride=STRIDE,
                                   padding=PAD, dilation=DIL))
    out = jax.block_until_ready(fn(x, dw_weight, pw_weight))
    assert out.shape == ref.shape, (out.shape, ref.shape)
    assert jnp.allclose(out, ref, atol=1e-4, rtol=1e-4), \
        float(jnp.max(jnp.abs(out - ref)))

    # 2) bf16 MXU path: bf16 patch/weights, f32 accumulation, f32 store.
    fn_bf16 = jax.jit(functools.partial(separable_conv2d, stride=STRIDE,
                                        padding=PAD, dilation=DIL,
                                        compute_dtype=jnp.bfloat16))
    out_bf16 = jax.block_until_ready(fn_bf16(x, dw_weight, pw_weight))
    assert out_bf16.shape == ref.shape, (out_bf16.shape, ref.shape)
    assert jnp.allclose(out_bf16, ref, atol=1e-2, rtol=1e-2), \
        float(jnp.max(jnp.abs(out_bf16 - ref)))

    print("KERNEL_OK")
</pallas_src>

<mosaic_0001>
module attributes {stable_mosaic.version = 11 : i64} {
  func.func @_sepconv_kernel(%arg0: i32, %arg1: i32, %arg2: memref<1x1x8x512xf32, #tpu.memory_space<vmem>>, %arg3: memref<8x72xf32, #tpu.memory_space<vmem>>, %arg4: memref<1x8x384xf32, #tpu.memory_space<vmem>>, %arg5: memref<72x384xf32, #tpu.memory_space<vmem>>) attributes {dimension_semantics = [#tpu.dimension_semantics<parallel>, #tpu.dimension_semantics<parallel>], iteration_bounds = array<i64: 2, 1>, scalar_prefetch = 0 : i64, scratch_operands = 1 : i64, tpu.core_type = #tpu.core_type<tc>, window_params = [{transform_indices = @transform_0, window_bounds = array<i64: 1, 1, 8, 512>}, {pipeline_mode = #tpu.pipeline_mode<synchronous>, transform_indices = @transform_1, window_bounds = array<i64: 8, 72>}, {transform_indices = @transform_2, window_bounds = array<i64: 1, 8, 384>}]} {
    %c0 = arith.constant 0 : index
    %c0_0 = arith.constant 0 : index
    %c0_1 = arith.constant 0 : index
    %c0_2 = arith.constant 0 : index
    %0 = vector.load %arg2[%c0, %c0_0, %c0_1, %c0_2] : memref<1x1x8x512xf32, #tpu.memory_space<vmem>>, vector<1x1x8x384xf32>
    %1 = vector.shape_cast %0 : vector<1x1x8x384xf32> to vector<8x384xf32>
    %c0_3 = arith.constant 0 : index
    %c0_4 = arith.constant 0 : index
    %2 = vector.load %arg5[%c0_3, %c0_4] : memref<72x384xf32, #tpu.memory_space<vmem>>, vector<8x384xf32>
    tpu.vector_store %arg5[%c0_3, %c0_4], %1 {strides = array<i32>} : memref<72x384xf32, #tpu.memory_space<vmem>>, vector<8x384xf32>,
    %c0_5 = arith.constant 0 : index
    %c0_6 = arith.constant 0 : index
    %c0_7 = arith.constant 0 : index
    %c1 = arith.constant 1 : index
    %3 = vector.load %arg2[%c0_5, %c0_6, %c0_7, %c1] : memref<1x1x8x512xf32, #tpu.memory_space<vmem>>, vector<1x1x8x384xf32>
    %4 = vector.shape_cast %3 : vector<1x1x8x384xf32> to vector<8x384xf32>
    %c8 = arith.constant 8 : index
    %c0_8 = arith.constant 0 : index
    %5 = vector.load %arg5[%c8, %c0_8] : memref<72x384xf32, #tpu.memory_space<vmem>>, vector<8x384xf32>
    tpu.vector_store %arg5[%c8, %c0_8], %4 {strides = array<i32>} : memref<72x384xf32, #tpu.memory_space<vmem>>, vector<8x384xf32>,
    %c0_9 = arith.constant 0 : index
    %c0_10 = arith.constant 0 : index
    %c0_11 = arith.constant 0 : index
    %c2 = arith.constant 2 : index
    %6 = vector.load %arg2[%c0_9, %c0_10, %c0_11, %c2] : memref<1x1x8x512xf32, #tpu.memory_space<vmem>>, vector<1x1x8x384xf32>
    %7 = vector.shape_cast %6 : vector<1x1x8x384xf32> to vector<8x384xf32>
    %c16 = arith.constant 16 : index
    %c0_12 = arith.constant 0 : index
    %8 = vector.load %arg5[%c16, %c0_12] : memref<72x384xf32, #tpu.memory_space<vmem>>, vector<8x384xf32>
    tpu.vector_store %arg5[%c16, %c0_12], %7 {strides = array<i32>} : memref<72x384xf32, #tpu.memory_space<vmem>>, vector<8x384xf32>,
    %c0_13 = arith.constant 0 : index
    %c0_14 = arith.constant 0 : index
    %c0_15 = arith.constant 0 : index
    %c18 = arith.constant 18 : index
    %9 = vector.load %arg2[%c0_13, %c0_14, %c0_15, %c18] : memref<1x1x8x512xf32, #tpu.memory_space<vmem>>, vector<1x1x8x384xf32>
    %10 = vector.shape_cast %9 : vector<1x1x8x384xf32> to vector<8x384xf32>
    %c24 = arith.constant 24 : index
    %c0_16 = arith.constant 0 : index
    %11 = vector.load %arg5[%c24, %c0_16] : memref<72x384xf32, #tpu.memory_space<vmem>>, vector<8x384xf32>
    tpu.vector_store %arg5[%c24, %c0_16], %10 {strides = array<i32>} : memref<72x384xf32, #tpu.memory_space<vmem>>, vector<8x384xf32>,
    %c0_17 = arith.constant 0 : index
    %c0_18 = arith.constant 0 : index
    %c0_19 = arith.constant 0 : index
    %c19 = arith.constant 19 : index
    %12 = vector.load %arg2[%c0_17, %c0_18, %c0_19, %c19] : memref<1x1x8x512xf32, #tpu.memory_space<vmem>>, vector<1x1x8x384xf32>
    %13 = vector.shape_cast %12 : vector<1x1x8x384xf32> to vector<8x384xf32>
    %c32 = arith.constant 32 : index
    %c0_20 = arith.constant 0 : index
    %14 = vector.load %arg5[%c32, %c0_20] : memref<72x384xf32, #tpu.memory_space<vmem>>, vector<8x384xf32>
    tpu.vector_store %arg5[%c32, %c0_20], %13 {strides = array<i32>} : memref<72x384xf32, #tpu.memory_space<vmem>>, vector<8x384xf32>,
    %c0_21 = arith.constant 0 : index
    %c0_22 = arith.constant 0 : index
    %c0_23 = arith.constant 0 : index
    %c20 = arith.constant 20 : index
    %15 = vector.load %arg2[%c0_21, %c0_22, %c0_23, %c20] : memref<1x1x8x512xf32, #tpu.memory_space<vmem>>, vector<1x1x8x384xf32>
    %16 = vector.shape_cast %15 : vector<1x1x8x384xf32> to vector<8x384xf32>
    %c40 = arith.constant 40 : index
    %c0_24 = arith.constant 0 : index
    %17 = vector.load %arg5[%c40, %c0_24] : memref<72x384xf32, #tpu.memory_space<vmem>>, vector<8x384xf32>
    tpu.vector_store %arg5[%c40, %c0_24], %16 {strides = array<i32>} : memref<72x384xf32, #tpu.memory_space<vmem>>, vector<8x384xf32>,
    %c0_25 = arith.constant 0 : index
    %c0_26 = arith.constant 0 : index
    %c0_27 = arith.constant 0 : index
    %c36 = arith.constant 36 : index
    %18 = vector.load %arg2[%c0_25, %c0_26, %c0_27, %c36] : memref<1x1x8x512xf32, #tpu.memory_space<vmem>>, vector<1x1x8x384xf32>
    %19 = vector.shape_cast %18 : vector<1x1x8x384xf32> to vector<8x384xf32>
    %c48 = arith.constant 48 : index
    %c0_28 = arith.constant 0 : index
    %20 = vector.load %arg5[%c48, %c0_28] : memref<72x384xf32, #tpu.memory_space<vmem>>, vector<8x384xf32>
    tpu.vector_store %arg5[%c48, %c0_28], %19 {strides = array<i32>} : memref<72x384xf32, #tpu.memory_space<vmem>>, vector<8x384xf32>,
    %c0_29 = arith.constant 0 : index
    %c0_30 = arith.constant 0 : index
    %c0_31 = arith.constant 0 : index
    %c37 = arith.constant 37 : index
    %21 = vector.load %arg2[%c0_29, %c0_30, %c0_31, %c37] : memref<1x1x8x512xf32, #tpu.memory_space<vmem>>, vector<1x1x8x384xf32>
    %22 = vector.shape_cast %21 : vector<1x1x8x384xf32> to vector<8x384xf32>
    %c56 = arith.constant 56 : index
    %c0_32 = arith.constant 0 : index
    %23 = vector.load %arg5[%c56, %c0_32] : memref<72x384xf32, #tpu.memory_space<vmem>>, vector<8x384xf32>
    tpu.vector_store %arg5[%c56, %c0_32], %22 {strides = array<i32>} : memref<72x384xf32, #tpu.memory_space<vmem>>, vector<8x384xf32>,
    %c0_33 = arith.constant 0 : index
    %c0_34 = arith.constant 0 : index
    %c0_35 = arith.constant 0 : index
    %c38 = arith.constant 38 : index
    %24 = vector.load %arg2[%c0_33, %c0_34, %c0_35, %c38] : memref<1x1x8x512xf32, #tpu.memory_space<vmem>>, vector<1x1x8x384xf32>
    %25 = vector.shape_cast %24 : vector<1x1x8x384xf32> to vector<8x384xf32>
    %c64 = arith.constant 64 : index
    %c0_36 = arith.constant 0 : index
    %26 = vector.load %arg5[%c64, %c0_36] : memref<72x384xf32, #tpu.memory_space<vmem>>, vector<8x384xf32>
    tpu.vector_store %arg5[%c64, %c0_36], %25 {strides = array<i32>} : memref<72x384xf32, #tpu.memory_space<vmem>>, vector<8x384xf32>,
    %c0_37 = arith.constant 0 : index
    %c0_38 = arith.constant 0 : index
    %27 = vector.load %arg3[%c0_37, %c0_38] : memref<8x72xf32, #tpu.memory_space<vmem>>, vector<8x72xf32>
    %c0_39 = arith.constant 0 : index
    %c0_40 = arith.constant 0 : index
    %28 = vector.load %arg5[%c0_39, %c0_40] : memref<72x384xf32, #tpu.memory_space<vmem>>, vector<72x384xf32>
    %cst = arith.constant dense<0.000000e+00> : vector<8x384xf32>
    %29 = tpu.matmul %27, %28, %cst {dimension_numbers = #tpu.dot_dimension_numbers<[1], [0], [0], [1], [0, 0, 1, 1], [], []>} : vector<8x72xf32>, vector<72x384xf32>, vector<8x384xf32> -> vector<8x384xf32>
    %c0_41 = arith.constant 0 : index
    %c0_42 = arith.constant 0 : index
    %c0_43 = arith.constant 0 : index
    %30 = vector.load %arg4[%c0_41, %c0_42, %c0_43] : memref<1x8x384xf32, #tpu.memory_space<vmem>>, vector<1x8x384xf32>
    %31 = vector.shape_cast %30 : vector<1x8x384xf32> to vector<8x384xf32>
    %32 = vector.shape_cast %29 : vector<8x384xf32> to vector<1x8x384xf32>
    tpu.vector_store %arg4[%c0_41, %c0_42, %c0_43], %32 {strides = array<i32>} : memref<1x8x384xf32, #tpu.memory_space<vmem>>, vector<1x8x384xf32>,
    return
  }
  func.func @transform_0(%arg0: i32, %arg1: i32) -> (i32, i32, i32, i32) {
    %c0_i32 = arith.constant 0 : i32
    %c0_i32_0 = arith.constant 0 : i32
    %c0_i32_1 = arith.constant 0 : i32
    return %arg0, %arg1, %c0_i32, %c0_i32_0 : i32, i32, i32, i32
  }
  func.func @transform_1(%arg0: i32, %arg1: i32) -> (i32, i32) {
    %c0_i32 = arith.constant 0 : i32
    %c0_i32_0 = arith.constant 0 : i32
    %c0_i32_1 = arith.constant 0 : i32
    return %c0_i32, %c0_i32_0 : i32, i32
  }
  func.func @transform_2(%arg0: i32, %arg1: i32) -> (i32, i32, i32) {
    %c0_i32 = arith.constant 0 : i32
    %c0_i32_0 = arith.constant 0 : i32
    return %arg0, %c0_i32, %arg1 : i32, i32, i32
  }
}

</mosaic_0001>

<llo_original>
// kernel: mul.11
$region0: #{mul.11}
  %s0 = inlined_call_operand.vmem [shape: f32[3,3,4], index: 0, kind: input, shape index: {}]
  %s1 = inlined_call_operand.vmem [shape: f32[9,4], index: 1, kind: output, shape index: {}]
  $region1: #{mul.11} parent=0
    #allocation0 [shape = 'u8[4096]{0}', space=vmem, size = 0x1000, scoped, tag = 'scoped mem for output reshape']
    #allocation1 [shape = 'u8[16384]{0}', space=vmem, size = 0x4000, scoped, tag = 'scoped mem for input reshape']
    %s3 = sshll.u32 1, 4
    %s4 = ssub.s32 %s3, 1
    %s5 = smul.addr 4, 3
    %s6 = scalar_lea.vmem %s0, %s5
    %v7 = vld [vmem:[%s6] sm:%s4]
    %s8 = scalar_lea.vmem [#allocation1], 24
    %9 = vst [vmem:[%s8] sm:%s4] %v7
    %s10 = smul.addr 4, 2
    %s11 = scalar_lea.vmem %s0, %s10
    %v12 = vld [vmem:[%s11] sm:%s4]
    %s13 = scalar_lea.vmem [#allocation1], 16
    %14 = vst [vmem:[%s13] sm:%s4] %v12
    %s15 = scalar_lea.vmem %s0, 4
    %v16 = vld [vmem:[%s15] sm:%s4]
    %s17 = scalar_lea.vmem [#allocation1], 8
    %18 = vst [vmem:[%s17] sm:%s4] %v16
    %v19 = vld [vmem:[%s0] sm:%s4]
    %20 = vst [vmem:[#allocation1] sm:%s4] %v19
    %v21 = vld [vmem:[#allocation1] ss:$8 sm:$0xf]
    %vm22 = vcmask 23552
    %23 = vst.msk [vmem:[#allocation0] sm:$0xf] %vm22, %v21
    %s24 = scalar_lea.vmem [#allocation1], 2
    %v25 = vld [vmem:[%s24] ss:$8 sm:$0xf]
    %26 = vrot.lane.b32.xlu0 %v25, 6
    %v27 = vpop.permute.xlu0 %26
    %vm28 = vcmask 72752
    %29 = vst.msk [vmem:[#allocation0] sm:$0xf] %vm28, %v27
    %s30 = scalar_lea.vmem [#allocation1], 1
    %v31 = vld [vmem:[%s30] ss:$8 sm:$0xf]
    %32 = vrot.lane.b32.xlu0 %v31, 3
    %v33 = vpop.permute.xlu0 %32
    %vm34 = vcmask 48152
    %35 = vst.msk [vmem:[#allocation0] sm:$0xf] %vm34, %v33
    %s37 = sshll.u32 1, 4
    %s38 = ssub.s32 %s37, 1
    %v40 = vld [vmem:[#allocation0] sm:%s38]
    %s41 = sshll.u32 1, 4
    %s42 = ssub.s32 %s41, 1
    %43 = vst [vmem:[%s1] sm:%s42] %v40

// kernel: separable_conv2d.1
$region0: #{separable_conv2d.1}
  #allocation0 [shape = 'u32[]', space=smem, size = 0x4, offset = 0x4, fixed_abs, tag = 'smem constant byte address 0x4 - core index']
  #allocation1 [shape = 'u32[144,128]{1,0:T(1,128)}', space=vmem, size = 0x12000, scoped, tag = 'internal scratch']
  #allocation2 [shape = 'f32[72,384]{1,0:T(8,128)}', space=vmem, size = 0x1b000, scoped, tag = 'scratch operand']
  %s0 = inlined_call_operand.vmem [shape: f32[2,1,8,512], index: 0, kind: input, shape index: {}]
  %s1 = inlined_call_operand.vmem [shape: f32[8,72], index: 1, kind: input, shape index: {}]
  %s2 = inlined_call_operand.vmem [shape: f32[2,8,384], index: 2, kind: output, shape index: {}]
  %s3 = sld [smem:[#allocation0]]
  $region41: #{separable_conv2d.1} parent=0
    _
  %s5 = ssub.s32 1, %s3
  %s6 = scalar_select 0, %s5, %s3
  loop: start=0, step=1, limit=4
  $region2: #{separable_conv2d.1} parent=0 // loop_pre_header
    _
  $region3: #{separable_conv2d.1} parent=0 // loop_header
    %s8 = sphi 0, %s12
    %p9 = scmp.ge.s32.totalorder %s8, 4
    %s15 = sphi 0, %s27
    %s16 = sphi 0, %s23
    %s17 = sphi 0, %s15
    %s18 = sphi 0, %s16
    %s19 = sphi 0, %s17
    %s20 = sphi 0, %s18
    %s32 = sphi 0, %s34
    %s35 = sphi 0, %s32
    %s36 = sphi 0, %s35
    %s52 = sphi 0, %s36
    %s56 = sphi 0, %s56
    %s58 = sphi 0, %s56
    %s59 = sphi 0, %s58
    %s73 = sphi 0, %s59
    %s81 = sphi 0, %s83
    %s84 = sphi 0, %s81
    %s85 = sphi 0, %s84
    %s101 = sphi 0, %s85
  $region4: #{separable_conv2d.1} parent=0 // loop_header_branch
    %11 = sbr.rel (%p9) target = $region8
  $region5: #{separable_conv2d.1} parent=0 // loop_body
    %s13 = ssub.s32 %s8, 1
    %s14 = ssub.s32 %s8, 2
    %s21 = sadd.s32 1, %s16
    %p22 = scmp.ge.s32.totalorder %s21, 1
    %s23 = scalar_select %p22, 0, %s21
    %s24 = sadd.s32 1, %s15
    %s25 = scalar_select %p22, %s24, %s15
    %p26 = scmp.ge.s32.totalorder %s25, 2
    %s27 = scalar_select %p26, 0, %s25
    %s28 = ssub.s32 %s15, %s27
    %s29 = ssub.s32 %s16, %s23
    %s30 = sor.u32 %s28, %s29
    %p31 = scmp.eq.s32.totalorder %s30, 0
    %s33 = sadd.s32 %s32, 1
    %s34 = scalar_select %p31, %s32, %s33
    %p37 = pneg %p31
    %p38 = scmp.eq.s32.totalorder %s8, 1
    %p39 = por %p37, %p38
    %p40 = scmp.ne.s32.totalorder %s32, %s35
    %p41 = scmp.eq.s32.totalorder %s8, 0
    %p42 = por %p40, %p41
    %p43 = scmp.ne.s32.totalorder %s32, %s35
    %p44 = scmp.eq.s32.totalorder %s13, 1
    %p45 = por %p43, %p44
    %p46 = scmp.ne.s32.totalorder %s35, %s36
    %p47 = scmp.eq.s32.totalorder %s13, 0
    %p48 = por %p46, %p47
    %p49 = scmp.ne.s32.totalorder %s35, %s36
    %p50 = scmp.eq.s32.totalorder %s14, 1
    %p51 = por %p49, %p50
    %p53 = scmp.ne.s32.totalorder %s36, %s52
    %p54 = scmp.eq.s32.totalorder %s14, 0
    %p55 = por %p53, %p54
    %s57 = sadd.s32 %s56, 1
    %p60 = scmp.eq.s32.totalorder %s8, 1
    %p61 = scmp.ne.s32.totalorder %s56, %s58
    %p62 = scmp.eq.s32.totalorder %s8, 0
    %p63 = por %p61, %p62
    %p64 = scmp.ne.s32.totalorder %s56, %s58
    %p65 = scmp.eq.s32.totalorder %s13, 1
    %p66 = por %p64, %p65
    %p67 = scmp.ne.s32.totalorder %s58, %s59
    %p68 = scmp.eq.s32.totalorder %s13, 0
    %p69 = por %p67, %p68
    %p70 = scmp.ne.s32.totalorder %s58, %s59
    %p71 = scmp.eq.s32.totalorder %s14, 1
    %p72 = por %p70, %p71
    %p74 = scmp.ne.s32.totalorder %s59, %s73
    %p75 = scmp.eq.s32.totalorder %s14, 0
    %p76 = por %p74, %p75
    %s77 = ssub.s32 %s15, %s27
    %s78 = ssub.s32 %s16, %s23
    %s79 = sor.u32 %s77, %s78
    %p80 = scmp.eq.s32.totalorder %s79, 0
    %s82 = sadd.s32 %s81, 1
    %s83 = scalar_select %p80, %s81, %s82
    %p86 = pneg %p80
    %p87 = scmp.eq.s32.totalorder %s8, 1
    %p88 = por %p86, %p87
    %p89 = scmp.ne.s32.totalorder %s81, %s84
    %p90 = scmp.eq.s32.totalorder %s8, 0
    %p91 = por %p89, %p90
    %p92 = scmp.ne.s32.totalorder %s81, %s84
    %p93 = scmp.eq.s32.totalorder %s13, 1
    %p94 = por %p92, %p93
    %p95 = scmp.ne.s32.totalorder %s84, %s85
    %p96 = scmp.eq.s32.totalorder %s13, 0
    %p97 = por %p95, %p96
    %p98 = scmp.ne.s32.totalorder %s84, %s85
    %p99 = scmp.eq.s32.totalorder %s14, 1
    %p100 = por %p98, %p99
    %p102 = scmp.ne.s32.totalorder %s85, %s101
    %p103 = scmp.eq.s32.totalorder %s14, 0
    %p104 = por %p102, %p103
    %p105 = scmp.le.s32.totalorder 1, %s8
    %p106 = scmp.lt.s32.totalorder %s8, 3
    %p107 = pnand %p105, %p106
    %p108 = pneg %p107
    // Predicated region
    $region9: #{separable_conv2d.1} parent=5 // pred_check
      _
    $region10: #{separable_conv2d.1} parent=5 // pred_check_branch
      %110 = sbr.rel (%p107) target = $region12
    $region11: #{separable_conv2d.1} parent=5 // pred_region
      %s111 = ssub.s32 %s8, 1
      // Predicated region
      $region13: #{separable_conv2d.1} parent=11 // pred_check
        %p112 = pneg %p69
      $region14: #{separable_conv2d.1} parent=11 // pred_check_branch
        %114 = sbr.rel (%p112) target = $region16
      $region15: #{separable_conv2d.1} parent=11 // pred_region
        _
      $region16: #{separable_conv2d.1} parent=11 // pred_fallthru
        _
    $region12: #{separable_conv2d.1} parent=5 // pred_fallthru
      _
    %p115 = scmp.lt.s32.totalorder %s8, 2
    // Predicated region
    $region17: #{separable_conv2d.1} parent=5 // pred_check
      %p116 = pneg %p115
    $region18: #{separable_conv2d.1} parent=5 // pred_check_branch
      %118 = sbr.rel (%p116) target = $region20
    $region19: #{separable_conv2d.1} parent=5 // pred_region
      // Predicated region
      $region21: #{separable_conv2d.1} parent=19 // pred_check
        %p119 = pneg %p42
      $region22: #{separable_conv2d.1} parent=19 // pred_check_branch
        %121 = sbr.rel (%p119) target = $region24
      $region23: #{separable_conv2d.1} parent=19 // pred_region
        %p122 = scmp.lt.s32.totalorder %s15, 1
        %s123 = scalar_select %p122, %s15, 1
        %p124 = scmp.lt.s32.totalorder %s16, 0
        %s125 = scalar_select %p124, %s16, 0
        %s126 = smul.addr %s125, 4
        %s127 = smul.addr %s123, 4
        %s128 = sadd.s32 %s126, %s127
        %s129 = smul.addr %s128, 8
        %s130 = scalar_lea.vmem %s0, %s129
      $region24: #{separable_conv2d.1} parent=19 // pred_fallthru
        _
    $region20: #{separable_conv2d.1} parent=5 // pred_fallthru
      _
    %p131 = scmp.le.s32.totalorder 1, %s8
    %p132 = scmp.lt.s32.totalorder %s8, 3
    %p133 = pnand %p131, %p132
    %p134 = pneg %p133
    // Predicated region
    $region25: #{separable_conv2d.1} parent=5 // pred_check
      _
    $region26: #{separable_conv2d.1} parent=5 // pred_check_branch
      %136 = sbr.rel (%p133) target = $region28
    $region27: #{separable_conv2d.1} parent=5 // pred_region
      %s137 = ssub.s32 %s8, 1
      %p138 = scmp.lt.s32.totalorder %s17, 1
      %s139 = scalar_select %p138, %s17, 1
      %p140 = scmp.lt.s32.totalorder %s18, 0
      %s141 = scalar_select %p140, %s18, 0
      %s142 = smul.addr %s141, 4
      %s143 = smul.addr %s139, 4
      %s144 = sadd.s32 %s142, %s143
      %s145 = smul.addr %s144, 8
      %s146 = scalar_lea.vmem %s0, %s145
      %p147 = pneg %p48
      %p148 = pneg %p45
      %p149 = pneg %p69
      %p150 = pneg %p66
      %p151 = pneg %p97
      %p152 = pneg %p94
      %s153 = smul.u32 3, %s18
      %p154 = scmp.lt.s32.totalorder %s17, 1
      %s155 = scalar_select %p154, %s17, 1
      %p156 = scmp.lt.s32.totalorder %s153, 2
      %s157 = scalar_select %p156, %s153, 2
      %s158 = smul.addr %s155, 3
      %s159 = sadd.s32 %s157, %s158
      %s160 = smul.addr %s159, 8
      %s161 = scalar_lea.vmem %s2, %s160
      %p162 = scmp.lt.s32.totalorder %s17, 1
      %s163 = scalar_select %p162, %s17, 1
      %p164 = scmp.lt.s32.totalorder %s18, 0
      %s165 = scalar_select %p164, %s18, 0
      %s166 = smul.addr %s165, 4
      %s167 = smul.addr %s163, 4
      %s168 = sadd.s32 %s166, %s167
      %s169 = smul.addr %s168, 8
      %s170 = scalar_lea.vmem %s0, %s169
      %s171 = smul.u32 3, %s18
      %p172 = scmp.lt.s32.totalorder %s17, 1
      %s173 = scalar_select %p172, %s17, 1
      %p174 = scmp.lt.s32.totalorder %s171, 2
      %s175 = scalar_select %p174, %s171, 2
      %s176 = smul.addr %s173, 3
      %s177 = sadd.s32 %s175, %s176
      %s178 = smul.addr %s177, 8
      %s179 = scalar_lea.vmem %s2, %s178
      %s180 = smul.u32 3, %s18
      %v181 = vld [vmem:[%s170] sm:$0xff]
      %v182 = vld [vmem:[%s170 + $0x8] sm:$0xff]
      %v183 = vld [vmem:[%s170 + $0x10] sm:$0xff]
      %184 = vst [vmem:[#allocation2] sm:$0xff] %v181
      %185 = vst [vmem:[#allocation2 + $0x8] sm:$0xff] %v182
      %186 = vst [vmem:[#allocation2 + $0x10] sm:$0xff] %v183
      %v187 = vld [vmem:[%s170] sm:$0xff]
      %v188 = vld [vmem:[%s170 + $0x8] sm:$0xff]
      %v189 = vld [vmem:[%s170 + $0x10] sm:$0xff]
      %v190 = vld [vmem:[%s170 + $0x18] sm:$0xff]
      %195 = vrot.lane.b32.xlu0 %v187, 127
      %v196 = vpop.permute.xlu0 %195
      %197 = vrot.lane.b32.xlu0 %v188, 127
      %v198 = vpop.permute.xlu0 %197
      %199 = vrot.lane.b32.xlu0 %v189, 127
      %v200 = vpop.permute.xlu0 %199
      %201 = vrot.lane.b32.xlu0 %v190, 127
      %v202 = vpop.permute.xlu0 %201
      %vm203 = vcmask 1039360
      %v204 = vsel %vm203, %v196, %v198
      %v205 = vsel %vm203, %v198, %v200
      %v206 = vsel %vm203, %v200, %v202
      %210 = vst [vmem:[#allocation2 + $0x18] sm:$0xff] %v204
      %211 = vst [vmem:[#allocation2 + $0x20] sm:$0xff] %v205
      %212 = vst [vmem:[#allocation2 + $0x28] sm:$0xff] %v206
      %v213 = vld [vmem:[%s170] sm:$0xff]
      %v214 = vld [vmem:[%s170 + $0x8] sm:$0xff]
      %v215 = vld [vmem:[%s170 + $0x10] sm:$0xff]
      %v216 = vld [vmem:[%s170 + $0x18] sm:$0xff]
      %221 = vrot.lane.b32.xlu0 %v213, 126
      %v222 = vpop.permute.xlu0 %221
      %223 = vrot.lane.b32.xlu0 %v214, 126
      %v224 = vpop.permute.xlu0 %223
      %225 = vrot.lane.b32.xlu0 %v215, 126
      %v226 = vpop.permute.xlu0 %225
      %227 = vrot.lane.b32.xlu0 %v216, 126
      %v228 = vpop.permute.xlu0 %227
      %vm229 = vcmask 1031168
      %v230 = vsel %vm229, %v222, %v224
      %v231 = vsel %vm229, %v224, %v226
      %v232 = vsel %vm229, %v226, %v228
      %236 = vst [vmem:[#allocation2 + $0x30] sm:$0xff] %v230
      %237 = vst [vmem:[#allocation2 + $0x38] sm:$0xff] %v231
      %238 = vst [vmem:[#allocation2 + $0x40] sm:$0xff] %v232
      %v239 = vld [vmem:[%s170] sm:$0xff]
      %v240 = vld [vmem:[%s170 + $0x8] sm:$0xff]
      %v241 = vld [vmem:[%s170 + $0x10] sm:$0xff]
      %v242 = vld [vmem:[%s170 + $0x18] sm:$0xff]
      %247 = vrot.lane.b32.xlu0 %v239, 110
      %v248 = vpop.permute.xlu0 %247
      %249 = vrot.lane.b32.xlu0 %v240, 110
      %v250 = vpop.permute.xlu0 %249
      %251 = vrot.lane.b32.xlu0 %v241, 110
      %v252 = vpop.permute.xlu0 %251
      %253 = vrot.lane.b32.xlu0 %v242, 110
      %v254 = vpop.permute.xlu0 %253
      %vm255 = vcmask 900096
      %v256 = vsel %vm255, %v248, %v250
      %v257 = vsel %vm255, %v250, %v252
      %v258 = vsel %vm255, %v252, %v254
      %262 = vst [vmem:[#allocation2 + $0x48] sm:$0xff] %v256
      %263 = vst [vmem:[#allocation2 + $0x50] sm:$0xff] %v257
      %264 = vst [vmem:[#allocation2 + $0x58] sm:$0xff] %v258
      %v265 = vld [vmem:[%s170] sm:$0xff]
      %v266 = vld [vmem:[%s170 + $0x8] sm:$0xff]
      %v267 = vld [vmem:[%s170 + $0x10] sm:$0xff]
      %v268 = vld [vmem:[%s170 + $0x18] sm:$0xff]
      %273 = vrot.lane.b32.xlu0 %v265, 109
      %v274 = vpop.permute.xlu0 %273
      %275 = vrot.lane.b32.xlu0 %v266, 109
      %v276 = vpop.permute.xlu0 %275
      %277 = vrot.lane.b32.xlu0 %v267, 109
      %v278 = vpop.permute.xlu0 %277
      %279 = vrot.lane.b32.xlu0 %v268, 109
      %v280 = vpop.permute.xlu0 %279
      %vm281 = vcmask 891904
      %v282 = vsel %vm281, %v274, %v276
      %v283 = vsel %vm281, %v276, %v278
      %v284 = vsel %vm281, %v278, %v280
      %288 = vst [vmem:[#allocation2 + $0x60] sm:$0xff] %v282
      %289 = vst [vmem:[#allocation2 + $0x68] sm:$0xff] %v283
      %290 = vst [vmem:[#allocation2 + $0x70] sm:$0xff] %v284
      %v291 = vld [vmem:[%s170] sm:$0xff]
      %v292 = vld [vmem:[%s170 + $0x8] sm:$0xff]
      %v293 = vld [vmem:[%s170 + $0x10] sm:$0xff]
      %v294 = vld [vmem:[%s170 + $0x18] sm:$0xff]
      %299 = vrot.lane.b32.xlu0 %v291, 108
      %v300 = vpop.permute.xlu0 %299
      %301 = vrot.lane.b32.xlu0 %v292, 108
      %v302 = vpop.permute.xlu0 %301
      %303 = vrot.lane.b32.xlu0 %v293, 108
      %v304 = vpop.permute.xlu0 %303
      %305 = vrot.lane.b32.xlu0 %v294, 108
      %v306 = vpop.permute.xlu0 %305
      %vm307 = vcmask 883712
      %v308 = vsel %vm307, %v300, %v302
      %v309 = vsel %vm307, %v302, %v304
      %v310 = vsel %vm307, %v304, %v306
      %314 = vst [vmem:[#allocation2 + $0x78] sm:$0xff] %v308
      %315 = vst [vmem:[#allocation2 + $0x80] sm:$0xff] %v309
      %316 = vst [vmem:[#allocation2 + $0x88] sm:$0xff] %v310
      %v317 = vld [vmem:[%s170] sm:$0xff]
      %v318 = vld [vmem:[%s170 + $0x8] sm:$0xff]
      %v319 = vld [vmem:[%s170 + $0x10] sm:$0xff]
      %v320 = vld [vmem:[%s170 + $0x18] sm:$0xff]
      %325 = vrot.lane.b32.xlu0 %v317, 92
      %v326 = vpop.permute.xlu0 %325
      %327 = vrot.lane.b32.xlu0 %v318, 92
      %v328 = vpop.permute.xlu0 %327
      %329 = vrot.lane.b32.xlu0 %v319, 92
      %v330 = vpop.permute.xlu0 %329
      %331 = vrot.lane.b32.xlu0 %v320, 92
      %v332 = vpop.permute.xlu0 %331
      %vm333 = vcmask 752640
      %v334 = vsel %vm333, %v326, %v328
      %v335 = vsel %vm333, %v328, %v330
      %v336 = vsel %vm333, %v330, %v332
      %340 = vst [vmem:[#allocation2 + $0x90] sm:$0xff] %v334
      %341 = vst [vmem:[#allocation2 + $0x98] sm:$0xff] %v335
      %342 = vst [vmem:[#allocation2 + $0xa0] sm:$0xff] %v336
      %v343 = vld [vmem:[%s170] sm:$0xff]
      %v344 = vld [vmem:[%s170 + $0x8] sm:$0xff]
      %v345 = vld [vmem:[%s170 + $0x10] sm:$0xff]
      %v346 = vld [vmem:[%s170 + $0x18] sm:$0xff]
      %351 = vrot.lane.b32.xlu0 %v343, 91
      %v352 = vpop.permute.xlu0 %351
      %353 = vrot.lane.b32.xlu0 %v344, 91
      %v354 = vpop.permute.xlu0 %353
      %355 = vrot.lane.b32.xlu0 %v345, 91
      %v356 = vpop.permute.xlu0 %355
      %357 = vrot.lane.b32.xlu0 %v346, 91
      %v358 = vpop.permute.xlu0 %357
      %vm359 = vcmask 744448
      %v360 = vsel %vm359, %v352, %v354
      %v361 = vsel %vm359, %v354, %v356
      %v362 = vsel %vm359, %v356, %v358
      %366 = vst [vmem:[#allocation2 + $0xa8] sm:$0xff] %v360
      %367 = vst [vmem:[#allocation2 + $0xb0] sm:$0xff] %v361
      %368 = vst [vmem:[#allocation2 + $0xb8] sm:$0xff] %v362
      %v369 = vld [vmem:[%s170] sm:$0xff]
      %v370 = vld [vmem:[%s170 + $0x8] sm:$0xff]
      %v371 = vld [vmem:[%s170 + $0x10] sm:$0xff]
      %v372 = vld [vmem:[%s170 + $0x18] sm:$0xff]
      %377 = vrot.lane.b32.xlu0 %v369, 90
      %v378 = vpop.permute.xlu0 %377
      %379 = vrot.lane.b32.xlu0 %v370, 90
      %v380 = vpop.permute.xlu0 %379
      %381 = vrot.lane.b32.xlu0 %v371, 90
      %v382 = vpop.permute.xlu0 %381
      %383 = vrot.lane.b32.xlu0 %v372, 90
      %v384 = vpop.permute.xlu0 %383
      %vm385 = vcmask 736256
      %v386 = vsel %vm385, %v378, %v380
      %v387 = vsel %vm385, %v380, %v382
      %v388 = vsel %vm385, %v382, %v384
      %392 = vst [vmem:[#allocation2 + $0xc0] sm:$0xff] %v386
      %393 = vst [vmem:[#allocation2 + $0xc8] sm:$0xff] %v387
      %394 = vst [vmem:[#allocation2 + $0xd0] sm:$0xff] %v388
      %v395 = vld [vmem:[%s1] sm:$0xff]
      %v396 = vld [vmem:[#allocation2] sm:$0xff]
      %v397 = vld [vmem:[#allocation2 + $0x8] sm:$0xff]
      %v398 = vld [vmem:[#allocation2 + $0x10] sm:$0xff]
      %v399 = vld [vmem:[#allocation2 + $0x18] sm:$0xff]
      %v400 = vld [vmem:[#allocation2 + $0x20] sm:$0xff]
      %v401 = vld [vmem:[#allocation2 + $0x28] sm:$0xff]
      %v402 = vld [vmem:[#allocation2 + $0x30] sm:$0xff]
      %v403 = vld [vmem:[#allocation2 + $0x38] sm:$0xff]
      %v404 = vld [vmem:[#allocation2 + $0x40] sm:$0xff]
      %v405 = vld [vmem:[#allocation2 + $0x48] sm:$0xff]
      %v406 = vld [vmem:[#allocation2 + $0x50] sm:$0xff]
      %v407 = vld [vmem:[#allocation2 + $0x58] sm:$0xff]
      %v408 = vld [vmem:[#allocation2 + $0x60] sm:$0xff]
      %v409 = vld [vmem:[#allocation2 + $0x68] sm:$0xff]
      %v410 = vld [vmem:[#allocation2 + $0x70] sm:$0xff]
      %v411 = vld [vmem:[#allocation2 + $0x78] sm:$0xff]
      %v412 = vld [vmem:[#allocation2 + $0x80] sm:$0xff]
      %v413 = vld [vmem:[#allocation2 + $0x88] sm:$0xff]
      %v414 = vld [vmem:[#allocation2 + $0x90] sm:$0xff]
      %v415 = vld [vmem:[#allocation2 + $0x98] sm:$0xff]
      %v416 = vld [vmem:[#allocation2 + $0xa0] sm:$0xff]
      %v417 = vld [vmem:[#allocation2 + $0xa8] sm:$0xff]
      %v418 = vld [vmem:[#allocation2 + $0xb0] sm:$0xff]
      %v419 = vld [vmem:[#allocation2 + $0xb8] sm:$0xff]
      %v420 = vld [vmem:[#allocation2 + $0xc0] sm:$0xff]
      %v421 = vld [vmem:[#allocation2 + $0xc8] sm:$0xff]
      %v422 = vld [vmem:[#allocation2 + $0xd0] sm:$0xff]
      %vm423 = vcmask 588800
      %v425 = vsel %vm423, %v395, 0
      %427 = vmatprep.subr.mxu0 0.0
      %428 = vmatpush1.msra.mxu0 0.0
      %429 = vmatprep.subr.mxu0 0.0
      %430 = vmatpush1.msra.mxu0 0.0
      %431 = vmatprep.subr.mxu0 0.0
      %432 = vmatpush1.msra.mxu0 0.0
      %433 = vmatprep.subr.mxu0 0.0
      %434 = vmatpush1.msra.mxu0 0.0
      %435 = vmatprep.subr.mxu0 0.0
      %436 = vmatpush1.msra.mxu0 0.0
      %437 = vmatprep.subr.mxu0 0.0
      %438 = vmatpush1.msra.mxu0 0.0
      %439 = vmatprep.subr.mxu0 0.0
      %440 = vmatpush1.msra.mxu0 0.0
      %441 = vmatprep.subr.mxu0 %v421
      %442 = vmatpush1.msra.mxu0 %v420
      %443 = vmatprep.subr.mxu0 %v418
      %444 = vmatpush1.msra.mxu0 %v417
      %445 = vmatprep.subr.mxu0 %v415
      %446 = vmatpush1.msra.mxu0 %v414
      %447 = vmatprep.subr.mxu0 %v412
      %448 = vmatpush1.msra.mxu0 %v411
      %449 = vmatprep.subr.mxu0 %v409
      %450 = vmatpush1.msra.mxu0 %v408
      %451 = vmatprep.subr.mxu0 %v406
      %452 = vmatpush1.msra.mxu0 %v405
      %453 = vmatprep.subr.mxu0 %v403
      %454 = vmatpush1.msra.mxu0 %v402
      %455 = vmatprep.subr.mxu0 %v400
      %456 = vmatpush1.msra.mxu0 %v399
      %457 = vmatprep.subr.mxu0 %v397
      %458 = vmatpush1.msra.mxu0 %v396
      %459 = vmatprep.subr.mxu0 0.0
      %460 = vmatpush2.msra.mxu0 0.0
      %461 = vmatprep.subr.mxu0 0.0
      %462 = vmatpush2.msra.mxu0 0.0
      %463 = vmatprep.subr.mxu0 0.0
      %464 = vmatpush2.msra.mxu0 0.0
      %465 = vmatprep.subr.mxu0 0.0
      %466 = vmatpush2.msra.mxu0 0.0
      %467 = vmatprep.subr.mxu0 0.0
      %468 = vmatpush2.msra.mxu0 0.0
      %469 = vmatprep.subr.mxu0 0.0
      %470 = vmatpush2.msra.mxu0 0.0
      %471 = vmatprep.subr.mxu0 0.0
      %472 = vmatpush2.msra.mxu0 0.0
      %473 = vmatprep.subr.mxu0 0.0
      %474 = vmatpush2.msra.mxu0 0.0
      %475 = vmatprep.subr.mxu0 0.0
      %476 = vmatpush2.msra.mxu0 0.0
      %477 = vmatprep.subr.mxu0 0.0
      %478 = vmatpush2.msra.mxu0 0.0
      %479 = vmatprep.subr.mxu0 0.0
      %480 = vmatpush2.msra.mxu0 0.0
      %481 = vmatprep.subr.mxu0 0.0
      %482 = vmatpush2.msra.mxu0 0.0
      %483 = vmatprep.subr.mxu0 0.0
      %484 = vmatpush2.msra.mxu0 0.0
      %485 = vmatprep.subr.mxu0 0.0
      %486 = vmatpush2.msra.mxu0 0.0
      %487 = vmatprep.subr.mxu0 0.0
      %488 = vmatpush2.msra.mxu0 0.0
      %489 = vmatprep.subr.mxu0 0.0
      %490 = vmatpush2.msra.mxu0 0.0
      %491 = vmatprep.mubr.f32.mxu0 0.0
      %492 = vmatmul.mubr.f32.gmra.mxu0 %v425
      %v493 = vpop.f32.mrf.mxu0
      %v494 = vadd.f32 0.0, %v493
      %v495 = vpop.f32.mrf.mxu0
      %v496 = vadd.f32 0.0, %v495
      %497 = vdwg.mxu0
      %498 = vmatprep.subr.mxu0 0.0
      %499 = vmatpush1.msra.mxu0 0.0
      %500 = vmatprep.subr.mxu0 0.0
      %501 = vmatpush1.msra.mxu0 0.0
      %502 = vmatprep.subr.mxu0 0.0
      %503 = vmatpush1.msra.mxu0 0.0
      %504 = vmatprep.subr.mxu0 0.0
      %505 = vmatpush1.msra.mxu0 0.0
      %506 = vmatprep.subr.mxu0 0.0
      %507 = vmatpush1.msra.mxu0 0.0
      %508 = vmatprep.subr.mxu0 0.0
      %509 = vmatpush1.msra.mxu0 0.0
      %510 = vmatprep.subr.mxu0 0.0
      %511 = vmatpush1.msra.mxu0 0.0
      %512 = vmatprep.subr.mxu0 0.0
      %513 = vmatpush1.msra.mxu0 %v422
      %514 = vmatprep.subr.mxu0 0.0
      %515 = vmatpush1.msra.mxu0 %v419
      %516 = vmatprep.subr.mxu0 0.0
      %517 = vmatpush1.msra.mxu0 %v416
      %518 = vmatprep.subr.mxu0 0.0
      %519 = vmatpush1.msra.mxu0 %v413
      %520 = vmatprep.subr.mxu0 0.0
      %521 = vmatpush1.msra.mxu0 %v410
      %522 = vmatprep.subr.mxu0 0.0
      %523 = vmatpush1.msra.mxu0 %v407
      %524 = vmatprep.subr.mxu0 0.0
      %525 = vmatpush1.msra.mxu0 %v404
      %526 = vmatprep.subr.mxu0 0.0
      %527 = vmatpush1.msra.mxu0 %v401
      %528 = vmatprep.subr.mxu0 0.0
      %529 = vmatpush1.msra.mxu0 %v398
      %530 = vmatprep.subr.mxu0 0.0
      %531 = vmatpush2.msra.mxu0 0.0
      %532 = vmatprep.subr.mxu0 0.0
      %533 = vmatpush2.msra.mxu0 0.0
      %534 = vmatprep.subr.mxu0 0.0
      %535 = vmatpush2.msra.mxu0 0.0
      %536 = vmatprep.subr.mxu0 0.0
      %537 = vmatpush2.msra.mxu0 0.0
      %538 = vmatprep.subr.mxu0 0.0
      %539 = vmatpush2.msra.mxu0 0.0
      %540 = vmatprep.subr.mxu0 0.0
      %541 = vmatpush2.msra.mxu0 0.0
      %542 = vmatprep.subr.mxu0 0.0
      %543 = vmatpush2.msra.mxu0 0.0
      %544 = vmatprep.subr.mxu0 0.0
      %545 = vmatpush2.msra.mxu0 0.0
      %546 = vmatprep.subr.mxu0 0.0
      %547 = vmatpush2.msra.mxu0 0.0
      %548 = vmatprep.subr.mxu0 0.0
      %549 = vmatpush2.msra.mxu0 0.0
      %550 = vmatprep.subr.mxu0 0.0
      %551 = vmatpush2.msra.mxu0 0.0
      %552 = vmatprep.subr.mxu0 0.0
      %553 = vmatpush2.msra.mxu0 0.0
      %554 = vmatprep.subr.mxu0 0.0
      %555 = vmatpush2.msra.mxu0 0.0
      %556 = vmatprep.subr.mxu0 0.0
      %557 = vmatpush2.msra.mxu0 0.0
      %558 = vmatprep.subr.mxu0 0.0
      %559 = vmatpush2.msra.mxu0 0.0
      %560 = vmatprep.subr.mxu0 0.0
      %561 = vmatpush2.msra.mxu0 0.0
      %562 = vmatprep.mubr.f32.mxu0 0.0
      %563 = vmatmul.mubr.f32.gmra.mxu0 %v425
      %v564 = vpop.f32.mrf.mxu0
      %v565 = vadd.f32 0.0, %v564
      %v566 = vpop.f32.mrf.mxu0
      %567 = vdwg.mxu0
      %568 = vst [vmem:[%s179] sm:$0xff] %v494
      %569 = vst [vmem:[%s179 + $0x8] sm:$0xff] %v496
      %570 = vst [vmem:[%s179 + $0x10] sm:$0xff] %v565
      %s571 = smul.u32 3, %s18
      %p572 = scmp.lt.s32.totalorder %s17, 1
      %s573 = scalar_select %p572, %s17, 1
      %p574 = scmp.lt.s32.totalorder %s571, 2
      %s575 = scalar_select %p574, %s571, 2
      %s576 = smul.addr %s573, 3
      %s577 = sadd.s32 %s575, %s576
      %s578 = smul.addr %s577, 8
      %s579 = scalar_lea.vmem %s2, %s578
      // Predicated region
      $region29: #{separable_conv2d.1} parent=27 // pred_check
        %p580 = pneg %p94
      $region30: #{separable_conv2d.1} parent=27 // pred_check_branch
        %582 = sbr.rel (%p580) target = $region32
      $region31: #{separable_conv2d.1} parent=27 // pred_region
        %s583 = smul.u32 3, %s18
      $region32: #{separable_conv2d.1} parent=27 // pred_fallthru
        _
    $region28: #{separable_conv2d.1} parent=5 // pred_fallthru
      _
    %p584 = scmp.le.s32.totalorder 2, %s8
    // Predicated region
    $region33: #{separable_conv2d.1} parent=5 // pred_check
      %p585 = pneg %p584
    $region34: #{separable_conv2d.1} parent=5 // pred_check_branch
      %587 = sbr.rel (%p585) target = $region36
    $region35: #{separable_conv2d.1} parent=5 // pred_region
      %s588 = ssub.s32 %s8, 2
      // Predicated region
      $region37: #{separable_conv2d.1} parent=35 // pred_check
        %p589 = pneg %p100
      $region38: #{separable_conv2d.1} parent=35 // pred_check_branch
        %591 = sbr.rel (%p589) target = $region40
      $region39: #{separable_conv2d.1} parent=35 // pred_region
        %s592 = smul.u32 3, %s20
        %p593 = scmp.lt.s32.totalorder %s19, 1
        %s594 = scalar_select %p593, %s19, 1
        %p595 = scmp.lt.s32.totalorder %s592, 2
        %s596 = scalar_select %p595, %s592, 2
        %s597 = smul.addr %s594, 3
        %s598 = sadd.s32 %s596, %s597
        %s599 = smul.addr %s598, 8
        %s600 = scalar_lea.vmem %s2, %s599
      $region40: #{separable_conv2d.1} parent=35 // pred_fallthru
        _
    $region36: #{separable_conv2d.1} parent=5 // pred_fallthru
      _
  $region6: #{separable_conv2d.1} parent=0 // loop_footer
    %s12 = sadd.s32 1, %s8
  $region7: #{separable_conv2d.1} parent=0 // loop_footer_branch
    %7 = sbr.rel target = $region3
  $region8: #{separable_conv2d.1} parent=0 // loop_exit
    _

</llo_original>
